<compile_context>
chip_gen: v5e
topology: v5e:2x2
jax: 0.10.0
libtpu: 0.0.40
codegen_flags: <defaults>
</compile_context>

<pallas_src>
import functools

import jax
import jax.numpy as jnp
from jax.experimental import pallas as pl
from jax.experimental.pallas import tpu as pltpu


# ----------------------------- in-kernel helpers -----------------------------

def _layernorm(x, gamma, beta, eps):
    # f32 statistics; gamma/beta broadcast from (1, D).
    mu = jnp.mean(x, axis=-1, keepdims=True)
    var = jnp.mean((x - mu) ** 2, axis=-1, keepdims=True)
    return (x - mu) * jax.lax.rsqrt(var + eps) * gamma + beta


def _gelu_tanh(x):
    # matches F.gelu(x, approximate='tanh'); kept in f32.
    c = jnp.float32(0.7978845608028654)  # sqrt(2/pi)
    return 0.5 * x * (1.0 + jnp.tanh(c * (x + 0.044715 * x * x * x)))


# --------------------------------- kernels ------------------------------------

def embed_kernel(p_ref, w_ref, b_ref, pos_ref, o_ref):
    # p_ref: (1, S, K) bf16   w_ref: (K, D) bf16   b_ref: (1, D) f32  pos: (S, D) f32
    emb = jnp.dot(p_ref[0], w_ref[...], preferred_element_type=jnp.float32)
    o_ref[0] = emb + b_ref[...] + pos_ref[...]


def encoder_layer_kernel(x_ref,
                         ln1g_ref, ln1b_ref,
                         qkvw_ref, qkvb_ref,
                         ow_ref, ob_ref,
                         ln2g_ref, ln2b_ref,
                         f1w_ref, f1b_ref, f2w_ref, f2b_ref,
                         o_ref,
                         xa_ref, h2_ref, acc_ref,
                         *, num_heads, head_dim, eps, scale):
    it = pl.program_id(1)

    # ------------- attention sub-block (runs once per batch row, it == 0) -----
    @pl.when(it == 0)
    def _attention():
        x = x_ref[0]                                          # (S, D) f32
        S, D = x.shape
        h = _layernorm(x, ln1g_ref[...], ln1b_ref[...], eps)
        # Fused QKV: one (S, D) @ (D, 3D) MXU matmul, bf16 in / f32 accumulate.
        qkv = jnp.dot(h.astype(jnp.bfloat16), qkvw_ref[...],
                      preferred_element_type=jnp.float32) + qkvb_ref[...]
        # Fold the softmax scale into q ((S, hd) multiply instead of (S, S)).
        q = (qkv[:, :D] * scale).astype(jnp.bfloat16)
        k = qkv[:, D:2 * D].astype(jnp.bfloat16)
        v = qkv[:, 2 * D:].astype(jnp.bfloat16)
        ow = ow_ref[...]                                      # (D, D) bf16

        # out_proj(concat_h(head_h)) == sum_h head_h @ W_o[h*hd:(h+1)*hd, :]
        # -> no jnp.concatenate, head outputs accumulate into a dense (S, D).
        # TODO(synk): for large S, tile the softmax flash-style instead of
        # materializing the full (S, S) score matrix per head.
        acc = jnp.zeros((S, D), jnp.float32)
        for hi in range(num_heads):
            lo = hi * head_dim
            qh = q[:, lo:lo + head_dim]
            kh = k[:, lo:lo + head_dim]
            vh = v[:, lo:lo + head_dim]
            s = jnp.dot(qh, kh.T, preferred_element_type=jnp.float32)
            s = s - jnp.max(s, axis=-1, keepdims=True)
            p = jnp.exp(s)
            p = p * pl.reciprocal(jnp.sum(p, axis=-1, keepdims=True), approx=True)
            oh = jnp.dot(p.astype(jnp.bfloat16), vh,
                         preferred_element_type=jnp.float32)
            acc = acc + jnp.dot(oh.astype(jnp.bfloat16), ow[lo:lo + head_dim, :],
                                preferred_element_type=jnp.float32)

        xa = x + acc + ob_ref[...]                            # residual in f32
        xa_ref[...] = xa
        h2_ref[...] = _layernorm(xa, ln2g_ref[...], ln2b_ref[...],
                                 eps).astype(jnp.bfloat16)
        acc_ref[...] = jnp.zeros_like(acc_ref)

    # ------------- MLP partial sum over this intermediate-dim tile ------------
    h1 = jnp.dot(h2_ref[...], f1w_ref[...],
                 preferred_element_type=jnp.float32) + f1b_ref[...]
    h1 = _gelu_tanh(h1)                                       # f32 elementwise
    acc_ref[...] += jnp.dot(h1.astype(jnp.bfloat16), f2w_ref[...],
                            preferred_element_type=jnp.float32)

    @pl.when(it == pl.num_programs(1) - 1)
    def _finalize():
        o_ref[0] = xa_ref[...] + acc_ref[...] + f2b_ref[...]


def layernorm_kernel(x_ref, g_ref, b_ref, o_ref, *, eps):
    o_ref[0] = _layernorm(x_ref[0], g_ref[...], b_ref[...], eps)


# --------------------------------- wrappers -----------------------------------

def patch_embed_call(patches, w, b, pos):
    B, S, K = patches.shape
    D = w.shape[1]
    full2d = lambda shape: pl.BlockSpec(shape, lambda bb: (0, 0))
    return pl.pallas_call(
        embed_kernel,
        out_shape=jax.ShapeDtypeStruct((B, S, D), jnp.float32),
        grid=(B,),
        in_specs=[
            pl.BlockSpec((1, S, K), lambda bb: (bb, 0, 0)),
            full2d((K, D)),
            full2d((1, D)),
            full2d((S, D)),
        ],
        out_specs=pl.BlockSpec((1, S, D), lambda bb: (bb, 0, 0)),
        compiler_params=pltpu.CompilerParams(dimension_semantics=("parallel",)),
    )(patches, w, b, pos)


def _pick_i_tile(I, max_tile=512):
    for t in (max_tile, 384, 256, 128):
        if t <= I and I % t == 0:
            return t
    return I


def encoder_layer_call(x, p, *, num_heads, head_dim, eps):
    B, S, D = x.shape
    I = p["fc1_w"].shape[1]
    ti = _pick_i_tile(I)
    n_i = I // ti

    const2d = lambda shape: pl.BlockSpec(shape, lambda b, i: (0, 0))
    kern = functools.partial(
        encoder_layer_kernel,
        num_heads=num_heads, head_dim=head_dim, eps=eps,
        scale=float(head_dim) ** -0.5)

    return pl.pallas_call(
        kern,
        out_shape=jax.ShapeDtypeStruct((B, S, D), jnp.float32),
        grid=(B, n_i),
        in_specs=[
            pl.BlockSpec((1, S, D), lambda b, i: (b, 0, 0)),   # activations
            const2d((1, D)), const2d((1, D)),                  # LN1 gamma/beta
            const2d((D, 3 * D)), const2d((1, 3 * D)),          # fused QKV
            const2d((D, D)), const2d((1, D)),                  # out proj
            const2d((1, D)), const2d((1, D)),                  # LN2 gamma/beta
            pl.BlockSpec((D, ti), lambda b, i: (0, i)),        # fc1_w tile
            pl.BlockSpec((1, ti), lambda b, i: (0, i)),        # fc1_b tile
            pl.BlockSpec((ti, D), lambda b, i: (i, 0)),        # fc2_w tile
            const2d((1, D)),                                   # fc2_b
        ],
        out_specs=pl.BlockSpec((1, S, D), lambda b, i: (b, 0, 0)),
        scratch_shapes=[
            pltpu.VMEM((S, D), jnp.float32),    # x + attn residual
            pltpu.VMEM((S, D), jnp.bfloat16),   # LN2 output (fc1 input)
            pltpu.VMEM((S, D), jnp.float32),    # fc2 accumulator
        ],
        compiler_params=pltpu.CompilerParams(
            dimension_semantics=("parallel", "arbitrary"),
            vmem_limit_bytes=64 * 1024 * 1024),
    )(x,
      p["ln1_g"], p["ln1_b"],
      p["qkv_w"], p["qkv_b"],
      p["o_w"], p["o_b"],
      p["ln2_g"], p["ln2_b"],
      p["fc1_w"], p["fc1_b"], p["fc2_w"], p["fc2_b"])


def layernorm_call(x, g, b, *, eps):
    B, S, D = x.shape
    full2d = lambda shape: pl.BlockSpec(shape, lambda bb: (0, 0))
    return pl.pallas_call(
        functools.partial(layernorm_kernel, eps=eps),
        out_shape=jax.ShapeDtypeStruct((B, S, D), jnp.float32),
        grid=(B,),
        in_specs=[
            pl.BlockSpec((1, S, D), lambda bb: (bb, 0, 0)),
            full2d((1, D)), full2d((1, D)),
        ],
        out_specs=pl.BlockSpec((1, S, D), lambda bb: (bb, 0, 0)),
        compiler_params=pltpu.CompilerParams(dimension_semantics=("parallel",)),
    )(x, g, b)


# ------------------------------ glue / params ---------------------------------

def extract_patches(pixel_values, patch_size):
    # pixel_values: [B, C, H, W] (NCHW, like PyTorch)
    B, C, H, W = pixel_values.shape
    P = patch_size
    gh, gw = H // P, W // P
    x = pixel_values.reshape(B, C, gh, P, gw, P)
    x = jnp.transpose(x, (0, 2, 4, 1, 3, 5))             # [B, gh, gw, C, P, P]
    return x.reshape(B, gh * gw, C * P * P)               # features ordered (c, ph, pw)


def init_params(key, cfg):
    D = cfg["hidden_size"]
    I = cfg["intermediate_size"]
    C = cfg["num_channels"]
    P = cfg["patch_size"]
    S = (cfg["image_size"] // P) ** 2
    K = C * P * P
    bf16 = jnp.bfloat16

    def nrm(k, shape, dtype=jnp.float32, scale=0.02):
        return (scale * jax.random.normal(k, shape, dtype=jnp.float32)).astype(dtype)

    keys = iter(jax.random.split(key, 8 + 8 * cfg["num_hidden_layers"]))
    params = {
        # conv weight [D, C, P, P] flattened to [K, D] (input-major), bf16.
        "patch_w": nrm(next(keys), (K, D), bf16),
        "patch_b": nrm(next(keys), (1, D)),
        "pos_emb": nrm(next(keys), (S, D)),
        "post_g": jnp.ones((1, D), jnp.float32),
        "post_b": jnp.zeros((1, D), jnp.float32),
        "layers": [],
    }
    for _ in range(cfg["num_hidden_layers"]):
        layer = {
            "ln1_g": jnp.ones((1, D), jnp.float32),
            "ln1_b": jnp.zeros((1, D), jnp.float32),
            # fused qkv_proj weight: columns ordered [q | k | v] like PyTorch.
            "qkv_w": nrm(next(keys), (D, 3 * D), bf16),
            "qkv_b": nrm(next(keys), (1, 3 * D)),
            "o_w": nrm(next(keys), (D, D), bf16),
            "o_b": nrm(next(keys), (1, D)),
            "ln2_g": jnp.ones((1, D), jnp.float32),
            "ln2_b": jnp.zeros((1, D), jnp.float32),
            "fc1_w": nrm(next(keys), (D, I), bf16),
            "fc1_b": nrm(next(keys), (1, I)),
            "fc2_w": nrm(next(keys), (I, D), bf16),
            "fc2_b": nrm(next(keys), (1, D)),
        }
        params["layers"].append(layer)
    return params


def siglip_vision_forward(pixel_values, params, cfg):
    D = cfg["hidden_size"]
    H = cfg["num_attention_heads"]
    head_dim = D // H
    eps = cfg["layer_norm_eps"]

    patches = extract_patches(pixel_values, cfg["patch_size"]).astype(jnp.bfloat16)
    embeddings = patch_embed_call(patches, params["patch_w"],
                                  params["patch_b"], params["pos_emb"])

    # Encoder (attention dropout p=0.0 -> identity in eval; not applied).
    hidden = embeddings
    for layer_params in params["layers"]:
        hidden = encoder_layer_call(hidden, layer_params,
                                    num_heads=H, head_dim=head_dim, eps=eps)

    # Faithful to the reference: post-LayerNorm of the *embeddings*, not of the
    # encoder output (bug in the PyTorch module).
    out = layernorm_call(embeddings, params["post_g"], params["post_b"], eps=eps)
    return out, hidden


# ----------------------------------- main --------------------------------------

if __name__ == "__main__":
    cfg = dict(
        hidden_size=64,
        intermediate_size=128,
        num_hidden_layers=2,
        num_attention_heads=2,
        num_channels=3,
        image_size=32,
        patch_size=8,
        layer_norm_eps=1e-6,
    )
    key = jax.random.PRNGKey(0)
    k_params, k_pix = jax.random.split(key)
    params = init_params(k_params, cfg)
    pixel_values = jax.random.normal(
        k_pix, (2, cfg["num_channels"], cfg["image_size"], cfg["image_size"]),
        dtype=jnp.float32)

    out, encoder_out = siglip_vision_forward(pixel_values, params, cfg)
    jax.block_until_ready(out)
    jax.block_until_ready(encoder_out)

    S = (cfg["image_size"] // cfg["patch_size"]) ** 2
    assert out.shape == (2, S, cfg["hidden_size"]), out.shape
    assert encoder_out.shape == (2, S, cfg["hidden_size"]), encoder_out.shape
    assert bool(jnp.all(jnp.isfinite(out)))
    assert bool(jnp.all(jnp.isfinite(encoder_out)))
    print("KERNEL_OK")
</pallas_src>

<mosaic_0001>
module attributes {stable_mosaic.version = 11 : i64} {
  func.func @embed_kernel(%arg0: i32, %arg1: memref<1x16x192xbf16, #tpu.memory_space<vmem>>, %arg2: memref<192x64xbf16, #tpu.memory_space<vmem>>, %arg3: memref<1x64xf32, #tpu.memory_space<vmem>>, %arg4: memref<16x64xf32, #tpu.memory_space<vmem>>, %arg5: memref<1x16x64xf32, #tpu.memory_space<vmem>>) attributes {dimension_semantics = [#tpu.dimension_semantics<parallel>], iteration_bounds = array<i64: 2>, scalar_prefetch = 0 : i64, scratch_operands = 0 : i64, tpu.core_type = #tpu.core_type<tc>, window_params = [{transform_indices = @transform_0, window_bounds = array<i64: 1, 16, 192>}, {pipeline_mode = #tpu.pipeline_mode<synchronous>, transform_indices = @transform_1, window_bounds = array<i64: 192, 64>}, {pipeline_mode = #tpu.pipeline_mode<synchronous>, transform_indices = @transform_2, window_bounds = array<i64: 1, 64>}, {pipeline_mode = #tpu.pipeline_mode<synchronous>, transform_indices = @transform_3, window_bounds = array<i64: 16, 64>}, {transform_indices = @transform_4, window_bounds = array<i64: 1, 16, 64>}]} {
    %c0 = arith.constant 0 : index
    %c0_0 = arith.constant 0 : index
    %c0_1 = arith.constant 0 : index
    %0 = vector.load %arg1[%c0, %c0_0, %c0_1] : memref<1x16x192xbf16, #tpu.memory_space<vmem>>, vector<1x16x192xbf16>
    %1 = vector.shape_cast %0 : vector<1x16x192xbf16> to vector<16x192xbf16>
    %c0_2 = arith.constant 0 : index
    %c0_3 = arith.constant 0 : index
    %2 = vector.load %arg2[%c0_2, %c0_3] : memref<192x64xbf16, #tpu.memory_space<vmem>>, vector<192x64xbf16>
    %cst = arith.constant dense<0.000000e+00> : vector<16x64xf32>
    %3 = tpu.matmul %1, %2, %cst {dimension_numbers = #tpu.dot_dimension_numbers<[1], [0], [0], [1], [0, 0, 1, 1], [], []>} : vector<16x192xbf16>, vector<192x64xbf16>, vector<16x64xf32> -> vector<16x64xf32>
    %c0_4 = arith.constant 0 : index
    %c0_5 = arith.constant 0 : index
    %4 = vector.load %arg3[%c0_4, %c0_5] : memref<1x64xf32, #tpu.memory_space<vmem>>, vector<1x64xf32>
    %5 = vector.broadcast %4 : vector<1x64xf32> to vector<16x64xf32>
    %6 = arith.addf %3, %5 : vector<16x64xf32>
    %c0_6 = arith.constant 0 : index
    %c0_7 = arith.constant 0 : index
    %7 = vector.load %arg4[%c0_6, %c0_7] : memref<16x64xf32, #tpu.memory_space<vmem>>, vector<16x64xf32>
    %8 = arith.addf %6, %7 : vector<16x64xf32>
    %c0_8 = arith.constant 0 : index
    %c0_9 = arith.constant 0 : index
    %c0_10 = arith.constant 0 : index
    %9 = vector.load %arg5[%c0_8, %c0_9, %c0_10] : memref<1x16x64xf32, #tpu.memory_space<vmem>>, vector<1x16x64xf32>
    %10 = vector.shape_cast %9 : vector<1x16x64xf32> to vector<16x64xf32>
    %11 = vector.shape_cast %8 : vector<16x64xf32> to vector<1x16x64xf32>
    tpu.vector_store %arg5[%c0_8, %c0_9, %c0_10], %11 {strides = array<i32>} : memref<1x16x64xf32, #tpu.memory_space<vmem>>, vector<1x16x64xf32>,
    return
  }
  func.func @transform_0(%arg0: i32) -> (i32, i32, i32) {
    %c0_i32 = arith.constant 0 : i32
    %c0_i32_0 = arith.constant 0 : i32
    %c0_i32_1 = arith.constant 0 : i32
    return %arg0, %c0_i32, %c0_i32_0 : i32, i32, i32
  }
  func.func @transform_1(%arg0: i32) -> (i32, i32) {
    %c0_i32 = arith.constant 0 : i32
    %c0_i32_0 = arith.constant 0 : i32
    %c0_i32_1 = arith.constant 0 : i32
    return %c0_i32, %c0_i32_0 : i32, i32
  }
  func.func @transform_2(%arg0: i32) -> (i32, i32) {
    %c0_i32 = arith.constant 0 : i32
    %c0_i32_0 = arith.constant 0 : i32
    %c0_i32_1 = arith.constant 0 : i32
    return %c0_i32, %c0_i32_0 : i32, i32
  }
  func.func @transform_3(%arg0: i32) -> (i32, i32) {
    %c0_i32 = arith.constant 0 : i32
    %c0_i32_0 = arith.constant 0 : i32
    %c0_i32_1 = arith.constant 0 : i32
    return %c0_i32, %c0_i32_0 : i32, i32
  }
  func.func @transform_4(%arg0: i32) -> (i32, i32, i32) {
    %c0_i32 = arith.constant 0 : i32
    %c0_i32_0 = arith.constant 0 : i32
    %c0_i32_1 = arith.constant 0 : i32
    return %arg0, %c0_i32, %c0_i32_0 : i32, i32, i32
  }
}

</mosaic_0001>

<llo_original>
// kernel: tpu_custom_call.1
$region0: #{tpu_custom_call.1}
  #allocation0 [shape = 'u32[]', space=smem, size = 0x4, offset = 0x4, fixed_abs, tag = 'smem constant byte address 0x4 - core index']
  #allocation1 [shape = 'u32[72,128]{1,0:T(1,128)}', space=vmem, size = 0x9000, scoped, tag = 'internal scratch']
  %s0 = inlined_call_operand.vmem [shape: bf16[2,16,192], index: 0, kind: input, shape index: {}]
  %s1 = inlined_call_operand.vmem [shape: bf16[192,64], index: 1, kind: input, shape index: {}]
  %s2 = inlined_call_operand.vmem [shape: f32[1,64], index: 2, kind: input, shape index: {}]
  %s3 = inlined_call_operand.vmem [shape: f32[16,64], index: 3, kind: input, shape index: {}]
  %s4 = inlined_call_operand.hbm [shape: f32[2,16,64], index: 4, kind: output, shape index: {}]
  %s5 = sld [smem:[#allocation0]]
  $region49: #{tpu_custom_call.1} parent=0
    _
  %s7 = ssub.s32 1, %s5
  %s8 = scalar_select 0, %s7, %s5
  $region1: #{tpu_custom_call.1} parent=0
    #allocation2 [shape = 'u8[16384]{0}', space=vmem, size = 0x4000, scoped, tag = 'output window, operand 0']
    #allocation3 [shape = 's32[2]{0}', space=sflag, size = 0x8, scoped, tag = 'scoped memory for tpu_custom_call.1']
    %9 = vsyncpa [#allocation3], 0
    %s10 = scalar_lea.sflag [#allocation3], 1
    %11 = vsyncpa %s10, 0
    loop: start=0, step=1, limit=4
    $region2: #{tpu_custom_call.1} parent=1 // loop_pre_header
      _
    $region3: #{tpu_custom_call.1} parent=1 // loop_header
      %s13 = sphi 0, %s17
      %p14 = scmp.ge.s32.totalorder %s13, 4
      %s23 = sphi 0, %s25
      %s26 = sphi 0, %s23
      %s27 = sphi 0, %s26
      %s43 = sphi 0, %s27
      %s47 = sphi 0, %s47
      %s49 = sphi 0, %s47
      %s50 = sphi 0, %s49
      %s64 = sphi 0, %s50
      %s68 = sphi 0, %s68
      %s70 = sphi 0, %s68
      %s71 = sphi 0, %s70
      %s85 = sphi 0, %s71
      %s89 = sphi 0, %s89
      %s91 = sphi 0, %s89
      %s92 = sphi 0, %s91
      %s106 = sphi 0, %s92
      %s112 = sphi 0, %s114
      %s115 = sphi 0, %s112
      %s116 = sphi 0, %s115
      %s132 = sphi 0, %s116
    $region4: #{tpu_custom_call.1} parent=1 // loop_header_branch
      %16 = sbr.rel (%p14) target = $region8
    $region5: #{tpu_custom_call.1} parent=1 // loop_body
      %s18 = ssub.s32 %s13, 1
      %s19 = ssub.s32 %s13, 2
      %s20 = sadd.s32 %s13, 1
      %s21 = ssub.s32 %s13, %s20
      %p22 = scmp.eq.s32.totalorder %s21, 0
      %s24 = sadd.s32 %s23, 1
      %s25 = scalar_select %p22, %s23, %s24
      %p28 = pneg %p22
      %p29 = scmp.eq.s32.totalorder %s13, 1
      %p30 = por %p28, %p29
      %p31 = scmp.ne.s32.totalorder %s23, %s26
      %p32 = scmp.eq.s32.totalorder %s13, 0
      %p33 = por %p31, %p32
      %p34 = scmp.ne.s32.totalorder %s23, %s26
      %p35 = scmp.eq.s32.totalorder %s18, 1
      %p36 = por %p34, %p35
      %p37 = scmp.ne.s32.totalorder %s26, %s27
      %p38 = scmp.eq.s32.totalorder %s18, 0
      %p39 = por %p37, %p38
      %p40 = scmp.ne.s32.totalorder %s26, %s27
      %p41 = scmp.eq.s32.totalorder %s19, 1
      %p42 = por %p40, %p41
      %p44 = scmp.ne.s32.totalorder %s27, %s43
      %p45 = scmp.eq.s32.totalorder %s19, 0
      %p46 = por %p44, %p45
      %s48 = sadd.s32 %s47, 1
      %p51 = scmp.eq.s32.totalorder %s13, 1
      %p52 = scmp.ne.s32.totalorder %s47, %s49
      %p53 = scmp.eq.s32.totalorder %s13, 0
      %p54 = por %p52, %p53
      %p55 = scmp.ne.s32.totalorder %s47, %s49
      %p56 = scmp.eq.s32.totalorder %s18, 1
      %p57 = por %p55, %p56
      %p58 = scmp.ne.s32.totalorder %s49, %s50
      %p59 = scmp.eq.s32.totalorder %s18, 0
      %p60 = por %p58, %p59
      %p61 = scmp.ne.s32.totalorder %s49, %s50
      %p62 = scmp.eq.s32.totalorder %s19, 1
      %p63 = por %p61, %p62
      %p65 = scmp.ne.s32.totalorder %s50, %s64
      %p66 = scmp.eq.s32.totalorder %s19, 0
      %p67 = por %p65, %p66
      %s69 = sadd.s32 %s68, 1
      %p72 = scmp.eq.s32.totalorder %s13, 1
      %p73 = scmp.ne.s32.totalorder %s68, %s70
      %p74 = scmp.eq.s32.totalorder %s13, 0
      %p75 = por %p73, %p74
      %p76 = scmp.ne.s32.totalorder %s68, %s70
      %p77 = scmp.eq.s32.totalorder %s18, 1
      %p78 = por %p76, %p77
      %p79 = scmp.ne.s32.totalorder %s70, %s71
      %p80 = scmp.eq.s32.totalorder %s18, 0
      %p81 = por %p79, %p80
      %p82 = scmp.ne.s32.totalorder %s70, %s71
      %p83 = scmp.eq.s32.totalorder %s19, 1
      %p84 = por %p82, %p83
      %p86 = scmp.ne.s32.totalorder %s71, %s85
      %p87 = scmp.eq.s32.totalorder %s19, 0
      %p88 = por %p86, %p87
      %s90 = sadd.s32 %s89, 1
      %p93 = scmp.eq.s32.totalorder %s13, 1
      %p94 = scmp.ne.s32.totalorder %s89, %s91
      %p95 = scmp.eq.s32.totalorder %s13, 0
      %p96 = por %p94, %p95
      %p97 = scmp.ne.s32.totalorder %s89, %s91
      %p98 = scmp.eq.s32.totalorder %s18, 1
      %p99 = por %p97, %p98
      %p100 = scmp.ne.s32.totalorder %s91, %s92
      %p101 = scmp.eq.s32.totalorder %s18, 0
      %p102 = por %p100, %p101
      %p103 = scmp.ne.s32.totalorder %s91, %s92
      %p104 = scmp.eq.s32.totalorder %s19, 1
      %p105 = por %p103, %p104
      %p107 = scmp.ne.s32.totalorder %s92, %s106
      %p108 = scmp.eq.s32.totalorder %s19, 0
      %p109 = por %p107, %p108
      %s110 = ssub.s32 %s13, %s20
      %p111 = scmp.eq.s32.totalorder %s110, 0
      %s113 = sadd.s32 %s112, 1
      %s114 = scalar_select %p111, %s112, %s113
      %p117 = pneg %p111
      %p118 = scmp.eq.s32.totalorder %s13, 1
      %p119 = por %p117, %p118
      %p120 = scmp.ne.s32.totalorder %s112, %s115
      %p121 = scmp.eq.s32.totalorder %s13, 0
      %p122 = por %p120, %p121
      %p123 = scmp.ne.s32.totalorder %s112, %s115
      %p124 = scmp.eq.s32.totalorder %s18, 1
      %p125 = por %p123, %p124
      %p126 = scmp.ne.s32.totalorder %s115, %s116
      %p127 = scmp.eq.s32.totalorder %s18, 0
      %p128 = por %p126, %p127
      %p129 = scmp.ne.s32.totalorder %s115, %s116
      %p130 = scmp.eq.s32.totalorder %s19, 1
      %p131 = por %p129, %p130
      %p133 = scmp.ne.s32.totalorder %s116, %s132
      %p134 = scmp.eq.s32.totalorder %s19, 0
      %p135 = por %p133, %p134
      %p136 = scmp.le.s32.totalorder 1, %s13
      %p137 = scmp.lt.s32.totalorder %s13, 3
      %p138 = pnand %p136, %p137
      %p139 = pneg %p138
      // Predicated region
      $region9: #{tpu_custom_call.1} parent=5 // pred_check
        _
      $region10: #{tpu_custom_call.1} parent=5 // pred_check_branch
        %141 = sbr.rel (%p138) target = $region12
      $region11: #{tpu_custom_call.1} parent=5 // pred_region
        %s142 = ssub.s32 %s13, 1
        // Predicated region
        $region13: #{tpu_custom_call.1} parent=11 // pred_check
          %p143 = pneg %p60
        $region14: #{tpu_custom_call.1} parent=11 // pred_check_branch
          %145 = sbr.rel (%p143) target = $region16
        $region15: #{tpu_custom_call.1} parent=11 // pred_region
          _
        $region16: #{tpu_custom_call.1} parent=11 // pred_fallthru
          _
        // Predicated region
        $region17: #{tpu_custom_call.1} parent=11 // pred_check
          %p146 = pneg %p81
        $region18: #{tpu_custom_call.1} parent=11 // pred_check_branch
          %148 = sbr.rel (%p146) target = $region20
        $region19: #{tpu_custom_call.1} parent=11 // pred_region
          _
        $region20: #{tpu_custom_call.1} parent=11 // pred_fallthru
          _
        // Predicated region
        $region21: #{tpu_custom_call.1} parent=11 // pred_check
          %p149 = pneg %p102
        $region22: #{tpu_custom_call.1} parent=11 // pred_check_branch
          %151 = sbr.rel (%p149) target = $region24
        $region23: #{tpu_custom_call.1} parent=11 // pred_region
          _
        $region24: #{tpu_custom_call.1} parent=11 // pred_fallthru
          _
      $region12: #{tpu_custom_call.1} parent=5 // pred_fallthru
        _
      %p152 = scmp.lt.s32.totalorder %s13, 2
      // Predicated region
      $region25: #{tpu_custom_call.1} parent=5 // pred_check
        %p153 = pneg %p152
      $region26: #{tpu_custom_call.1} parent=5 // pred_check_branch
        %155 = sbr.rel (%p153) target = $region28
      $region27: #{tpu_custom_call.1} parent=5 // pred_region
        // Predicated region
        $region29: #{tpu_custom_call.1} parent=27 // pred_check
          %p156 = pneg %p33
        $region30: #{tpu_custom_call.1} parent=27 // pred_check_branch
          %158 = sbr.rel (%p156) target = $region32
        $region31: #{tpu_custom_call.1} parent=27 // pred_region
          %p159 = scmp.lt.s32.totalorder %s13, 1
          %s160 = scalar_select %p159, %s13, 1
          %s161 = smul.addr %s160, 4
          %s162 = smul.addr %s161, 4
          %s163 = scalar_lea.vmem %s0, %s162
        $region32: #{tpu_custom_call.1} parent=27 // pred_fallthru
          _
      $region28: #{tpu_custom_call.1} parent=5 // pred_fallthru
        _
      %p164 = scmp.le.s32.totalorder 1, %s13
      %p165 = scmp.lt.s32.totalorder %s13, 3
      %p166 = pnand %p164, %p165
      %p167 = pneg %p166
      // Predicated region
      $region33: #{tpu_custom_call.1} parent=5 // pred_check
        _
      $region34: #{tpu_custom_call.1} parent=5 // pred_check_branch
        %169 = sbr.rel (%p166) target = $region36
      $region35: #{tpu_custom_call.1} parent=5 // pred_region
        %s170 = ssub.s32 %s13, 1
        %p171 = scmp.lt.s32.totalorder %s18, 1
        %s172 = scalar_select %p171, %s18, 1
        %s173 = smul.addr %s172, 4
        %s174 = smul.addr %s173, 4
        %s175 = scalar_lea.vmem %s0, %s174
        %p176 = pneg %p39
        %p177 = pneg %p36
        %p178 = pneg %p60
        %p179 = pneg %p57
        %p180 = pneg %p81
        %p181 = pneg %p78
        %p182 = pneg %p102
        %p183 = pneg %p99
        %p184 = pneg %p128
        %p185 = pneg %p125
        %s186 = sand.u32 %s115, 1
        %s187 = scalar_lea.sflag [#allocation3], %s186
        %s188 = sand.u32 %s115, 1
        %s189 = smul.addr %s188, 16
        %s190 = scalar_lea.vmem [#allocation2], %s189
        %p191 = scmp.lt.s32.totalorder %s18, 1
        %s192 = scalar_select %p191, %s18, 1
        %s193 = smul.addr %s192, 4
        %s194 = smul.addr %s193, 4
        %s195 = scalar_lea.vmem %s0, %s194
        %v197 = vld [vmem:[%s195] sm:$0xff]
        %v198 = vld [vmem:[%s195 + $0x8] sm:$0xff]
        %v199 = vld [vmem:[%s1] sm:$0xf]
        %v200 = vld [vmem:[%s1 + $0x4] sm:$0xf]
        %v201 = vld [vmem:[%s1 + $0x8] sm:$0xf]
        %v202 = vld [vmem:[%s1 + $0xc] sm:$0xf]
        %v203 = vld [vmem:[%s1 + $0x10] sm:$0xf]
        %v204 = vld [vmem:[%s1 + $0x14] sm:$0xf]
        %v205 = vld [vmem:[%s1 + $0x18] sm:$0xf]
        %v206 = vld [vmem:[%s1 + $0x1c] sm:$0xf]
        %v207 = vld [vmem:[%s1 + $0x20] sm:$0xf]
        %v208 = vld [vmem:[%s1 + $0x24] sm:$0xf]
        %v209 = vld [vmem:[%s1 + $0x28] sm:$0xf]
        %v210 = vld [vmem:[%s1 + $0x2c] sm:$0xf]
        %v211 = vld [vmem:[%s1 + $0x30] sm:$0xf]
        %v212 = vld [vmem:[%s1 + $0x34] sm:$0xf]
        %v213 = vld [vmem:[%s1 + $0x38] sm:$0xf]
        %v214 = vld [vmem:[%s1 + $0x3c] sm:$0xf]
        %v215 = vld [vmem:[%s1 + $0x40] sm:$0xf]
        %v216 = vld [vmem:[%s1 + $0x44] sm:$0xf]
        %v217 = vld [vmem:[%s1 + $0x48] sm:$0xf]
        %v218 = vld [vmem:[%s1 + $0x4c] sm:$0xf]
        %v219 = vld [vmem:[%s1 + $0x50] sm:$0xf]
        %v220 = vld [vmem:[%s1 + $0x54] sm:$0xf]
        %v221 = vld [vmem:[%s1 + $0x58] sm:$0xf]
        %v222 = vld [vmem:[%s1 + $0x5c] sm:$0xf]
        %v223 = vld [vmem:[%s2] sm:$0x1]
        %v225 = vperm.slane %v223, 0
        %v229 = vunpack.c.l.b16 %v197
        %v230 = vunpack.c.h.b16 %v197
        %v231 = vunpack.c.l.b16 %v198
        %v232 = vunpack.c.h.b16 %v198
        %v233 = vpack.c.b16 %v231, %v229
        %v234 = vpack.c.b16 %v232, %v230
        %v260 = vunpack.c.l.b16 %v199
        %v261 = vunpack.c.l.b16 %v200
        %v262 = vunpack.c.l.b16 %v201
        %v263 = vunpack.c.l.b16 %v202
        %v264 = vunpack.c.l.b16 %v203
        %v265 = vunpack.c.l.b16 %v204
        %v266 = vunpack.c.l.b16 %v205
        %v267 = vunpack.c.l.b16 %v206
        %v268 = vunpack.c.l.b16 %v207
        %v269 = vunpack.c.l.b16 %v208
        %v270 = vunpack.c.l.b16 %v209
        %v271 = vunpack.c.l.b16 %v210
        %v272 = vunpack.c.l.b16 %v211
        %v273 = vunpack.c.l.b16 %v212
        %v274 = vunpack.c.l.b16 %v213
        %v275 = vunpack.c.l.b16 %v214
        %v276 = vunpack.c.l.b16 %v215
        %v277 = vunpack.c.l.b16 %v216
        %v278 = vunpack.c.l.b16 %v217
        %v279 = vunpack.c.l.b16 %v218
        %v280 = vunpack.c.l.b16 %v219
        %v281 = vunpack.c.l.b16 %v220
        %v282 = vunpack.c.l.b16 %v221
        %v283 = vunpack.c.l.b16 %v222
        %v284 = vpack.c.b16 %v261, %v260
        %v285 = vpack.c.b16 %v263, %v262
        %v286 = vpack.c.b16 %v265, %v264
        %v287 = vpack.c.b16 %v267, %v266
        %v288 = vpack.c.b16 %v269, %v268
        %v289 = vpack.c.b16 %v271, %v270
        %v290 = vpack.c.b16 %v273, %v272
        %v291 = vpack.c.b16 %v275, %v274
        %v292 = vpack.c.b16 %v277, %v276
        %v293 = vpack.c.b16 %v279, %v278
        %v294 = vpack.c.b16 %v281, %v280
        %v295 = vpack.c.b16 %v283, %v282
        %vm308 = vcmask 523264
        %v310 = vsel %vm308, %v234, 0
        %312 = vmatpush.bf16.msra.mxu0 %v291
        %313 = vmatpush.bf16.msra.mxu0 %v290
        %314 = vmatpush.bf16.msra.mxu0 %v289
        %315 = vmatpush.bf16.msra.mxu0 %v288
        %316 = vmatpush.bf16.msra.mxu0 %v287
        %317 = vmatpush.bf16.msra.mxu0 %v286
        %318 = vmatpush.bf16.msra.mxu0 %v285
        %319 = vmatpush.bf16.msra.mxu0 %v284
        %320 = vmatmul.bf16.gmra.mxu0 %v233
        %v321 = vpop.f32.mrf.mxu0
        %v322 = vadd.f32 %v225, %v321
        %v323 = vpop.f32.mrf.mxu0
        %v324 = vadd.f32 %v225, %v323
        %325 = vdwg.mxu0
        %326 = vmatpush.bf16.msra.mxu0 0
        %327 = vmatpush.bf16.msra.mxu0 0
        %328 = vmatpush.bf16.msra.mxu0 0
        %329 = vmatpush.bf16.msra.mxu0 0
        %330 = vmatpush.bf16.msra.mxu0 %v295
        %331 = vmatpush.bf16.msra.mxu0 %v294
        %332 = vmatpush.bf16.msra.mxu0 %v293
        %333 = vmatpush.bf16.msra.mxu0 %v292
        %334 = vmatmul.bf16.gmra.mxu0 %v310
        %v335 = vpop.f32.mrf.mxu0
        %v336 = vadd.f32 %v322, %v335
        %v337 = vpop.f32.mrf.mxu0
        %v338 = vadd.f32 %v324, %v337
        %339 = vdwg.mxu0
        %v340 = vld [vmem:[%s3] sm:$0xff]
        %v341 = vld [vmem:[%s3 + $0x8] sm:$0xff]
        %v342 = vadd.f32 %v336, %v340
        %v343 = vadd.f32 %v338, %v341
        %344 = vst.msk [vmem:[%s190] sm:$0xff] %vm308, %v342
        %345 = vst.msk [vmem:[%s190 + $0x8] sm:$0xff] %vm308, %v343
        %s346 = sand.u32 %s115, 1
        %s347 = scalar_lea.sflag [#allocation3], %s346
        %s348 = sand.u32 %s115, 1
        %s349 = smul.addr %s348, 16
        %s350 = scalar_lea.vmem [#allocation2], %s349
        // Predicated region
        $region37: #{tpu_custom_call.1} parent=35 // pred_check
          %p351 = pneg %p125
        $region38: #{tpu_custom_call.1} parent=35 // pred_check_branch
          %353 = sbr.rel (%p351) target = $region40
        $region39: #{tpu_custom_call.1} parent=35 // pred_region
          %355 = vsyncadd %s347, 0
          %s356 = smul.addr %s18, 2
          %s357 = smul.addr %s356, 8
          %s358 = scalar_lea.hbm %s4, %s357
          %s359 = sshll.u32 %s350, 4
          %s360 = int_to_ptr.vmem [resolvable:$true] %s359
          %s361 = sshll.u32 %s358, 4
          %s362 = int_to_ptr.hbm [resolvable:$true] %s361
          %367 = dma.vmem_to_hbm [thread:$0]  %s360, 256, %s362, %s347, 128, 128, 8
        $region40: #{tpu_custom_call.1} parent=35 // pred_fallthru
          _
      $region36: #{tpu_custom_call.1} parent=5 // pred_fallthru
        _
      %p368 = scmp.le.s32.totalorder 2, %s13
      // Predicated region
      $region41: #{tpu_custom_call.1} parent=5 // pred_check
        %p369 = pneg %p368
      $region42: #{tpu_custom_call.1} parent=5 // pred_check_branch
        %371 = sbr.rel (%p369) target = $region44
      $region43: #{tpu_custom_call.1} parent=5 // pred_region
        %s372 = ssub.s32 %s13, 2
        // Predicated region
        $region45: #{tpu_custom_call.1} parent=43 // pred_check
          %p373 = pneg %p131
        $region46: #{tpu_custom_call.1} parent=43 // pred_check_branch
          %375 = sbr.rel (%p373) target = $region48
        $region47: #{tpu_custom_call.1} parent=43 // pred_region
          %s376 = sand.u32 %s116, 1
          %s377 = scalar_lea.sflag [#allocation3], %s376
          %s378 = sand.u32 %s116, 1
          %s379 = smul.addr %s378, 16
          %s380 = scalar_lea.vmem [#allocation2], %s379
          %382 = dma.done %s377, 256
        $region48: #{tpu_custom_call.1} parent=43 // pred_fallthru
          _
      $region44: #{tpu_custom_call.1} parent=5 // pred_fallthru
        _
    $region6: #{tpu_custom_call.1} parent=1 // loop_footer
      %s17 = sadd.s32 1, %s13
    $region7: #{tpu_custom_call.1} parent=1 // loop_footer_branch
      %12 = sbr.rel target = $region3
    $region8: #{tpu_custom_call.1} parent=1 // loop_exit
      _
    %383 = vsyncpa [#allocation3], 1
    %s384 = scalar_lea.sflag [#allocation3], 1
    %385 = vsyncpa %s384, 1

</llo_original>
